<compile_context>
chip_gen: v5e
topology: v5e:2x2
jax: 0.10.0
libtpu: 0.0.40
codegen_flags: <defaults>
</compile_context>

<pallas_src>
import jax
import jax.numpy as jnp
from jax.experimental import pallas as pl
from jax.experimental.pallas import tpu as pltpu


def _round_up(v, m):
    return ((v + m - 1) // m) * m


# ---------------------------------------------------------------------------
# Kernels
# ---------------------------------------------------------------------------

def _mixup_x_tiled_kernel(perm_ref, coeff_ref, x_ref, xperm_ref, o_ref):
    """One sample x one feature tile per grid step (large-sample path).

    x[perm[i]] arrives via the scalar-prefetch index_map, so the permuted
    stream is pipelined by the BlockSpec machinery like the others.
    """
    i = pl.program_id(0)
    c = coeff_ref[i]                                   # f32 scalar from SMEM
    xp = xperm_ref[...].astype(jnp.float32)
    xi = x_ref[...].astype(jnp.float32)
    # FMA-style blend: c*x + (1-c)*xp == xp + c*(x - xp)
    o_ref[...] = (xp + c * (xi - xp)).astype(o_ref.dtype)


def _mixup_x_packed_kernel(perm_ref, coeff_ref, x_ref, xhbm_ref, o_ref,
                           gbuf, gsem):
    """K samples per grid step (small-sample path).

    x[i..i+K-1] / out are BlockSpec-pipelined VMEM blocks; the K permuted
    slabs are gathered with K manual DMAs from the raw HBM ref into VMEM
    scratch (no HBM materialization of x[perm], no per-sample grid step).
    """
    K = x_ref.shape[0]
    base = pl.program_id(0) * K

    # Scalar reads before any DMA wait (keeps SMEM sst->sld forwarding alive).
    cs = [coeff_ref[base + k] for k in range(K)]

    copies = []
    for k in range(K):                                 # static unroll
        cp = pltpu.make_async_copy(
            xhbm_ref.at[perm_ref[base + k]], gbuf.at[k], gsem.at[k])
        cp.start()
        copies.append(cp)
    for cp in copies:
        cp.wait()

    for k in range(K):                                 # static unroll
        xp = gbuf[k].astype(jnp.float32)
        xi = x_ref[k].astype(jnp.float32)
        o_ref[k] = (xp + cs[k] * (xi - xp)).astype(o_ref.dtype)


# ---------------------------------------------------------------------------
# Tiling / dispatch
# ---------------------------------------------------------------------------

def _choose_tiling(n_feat, itemsize, rows_per_step, max_block_bytes):
    """Pick (rows, lanes, n_pad) for the per-sample (rows, lanes) slab.

    Prefers an exact factorization n_feat == rows * lanes (no jnp.pad / output
    slice => no extra HBM passes); falls back to a padded layout otherwise.
    """
    lane_cap = max(128, max_block_bytes // (rows_per_step * itemsize))
    m_lo = max(1, -(-n_feat // (lane_cap * rows_per_step)))
    m_hi = max(m_lo, n_feat // (128 * rows_per_step))
    m_hi = min(m_hi, m_lo + 4096)                      # bound trace-time search
    for m in range(m_lo, m_hi + 1):
        rows = m * rows_per_step
        if n_feat % rows == 0:
            lanes = n_feat // rows
            if lanes >= 128 or m == 1:
                return rows, lanes, n_feat
    # Fallback: pad the flattened feature axis.
    # TODO(synk): the pad + final slice each cost an extra HBM pass; a masked
    # tail tile inside the kernel would remove them for awkward sizes.
    lane_needed = _round_up(-(-n_feat // rows_per_step), 128)
    lanes = max(128, min((lane_cap // 128) * 128, lane_needed))
    n_pad = _round_up(n_feat, rows_per_step * lanes)
    return n_pad // lanes, lanes, n_pad


def mixup_x_pallas(x, perm, coeffs, *, max_block_bytes=4 * 1024 * 1024,
                   max_samples_per_step=8):
    """x_mix = coeffs*x + (1-coeffs)*x[perm], mixed over the batch axis."""
    orig_shape = x.shape
    B = orig_shape[0]
    N = 1
    for d in orig_shape[1:]:
        N *= d
    itemsize = jnp.dtype(x.dtype).itemsize

    perm = jnp.clip(perm.astype(jnp.int32), 0, B - 1)   # guard OOB gathers
    coeffs = coeffs.astype(jnp.float32)

    # dtype-aware sublane count: full (8,128)/(16,128)/(32,128) vregs per tile.
    rows_per_step = max(8, 32 // itemsize)

    rows, lanes, n_pad = _choose_tiling(N, itemsize, rows_per_step,
                                        max_block_bytes)
    feat_tiles = rows // rows_per_step

    x_flat = x.reshape(B, N)
    if n_pad != N:
        x_flat = jnp.pad(x_flat, ((0, 0), (0, n_pad - N)))
    x3 = x_flat.reshape(B, rows, lanes)

    cost = pl.CostEstimate(flops=3 * B * N, transcendentals=0,
                           bytes_accessed=3 * B * N * itemsize)

    # How many samples per step (only when the whole sample is a single tile).
    samples_per_step = 1
    if feat_tiles == 1:
        slab_bytes = rows * lanes * itemsize
        for cand in (max_samples_per_step, 4, 2):
            if cand > 1 and B % cand == 0 and cand * slab_bytes <= max_block_bytes:
                samples_per_step = cand
                break

    # TODO(synk): on v7x verify the grid really shards across both TensorCores;
    # if "parallel" does not, switch the batch axis to pltpu.CORE_PARALLEL.

    if samples_per_step > 1:
        K = samples_per_step
        block_bytes = K * rows * lanes * itemsize
        grid_spec = pltpu.PrefetchScalarGridSpec(
            num_scalar_prefetch=2,                       # perm, coeffs -> SMEM
            grid=(B // K,),
            in_specs=[
                pl.BlockSpec((K, rows, lanes), lambda b, perm, coeff: (b, 0, 0)),
                pl.BlockSpec(memory_space=pl.ANY),       # raw HBM for gathers
            ],
            out_specs=pl.BlockSpec((K, rows, lanes),
                                   lambda b, perm, coeff: (b, 0, 0)),
            scratch_shapes=[
                pltpu.VMEM((K, rows, lanes), x3.dtype),
                pltpu.SemaphoreType.DMA((K,)),
            ],
        )
        out = pl.pallas_call(
            _mixup_x_packed_kernel,
            out_shape=jax.ShapeDtypeStruct((B, rows, lanes), x3.dtype),
            grid_spec=grid_spec,
            compiler_params=pltpu.CompilerParams(
                dimension_semantics=("parallel",),
                vmem_limit_bytes=int(min(32 << 20,
                                         max(16 << 20,
                                             6 * block_bytes + (2 << 20)))),
            ),
            cost_estimate=cost,
        )(perm, coeffs, x3, x3)
    else:
        block_bytes = rows_per_step * lanes * itemsize
        grid_spec = pltpu.PrefetchScalarGridSpec(
            num_scalar_prefetch=2,                       # perm, coeffs -> SMEM
            grid=(B, feat_tiles),
            in_specs=[
                # x[i], feature tile j
                pl.BlockSpec((1, rows_per_step, lanes),
                             lambda i, j, perm, coeff: (i, j, 0)),
                # x[perm[i]], feature tile j (data-dependent block index; no
                # HBM materialization of x[perm]).  pipeline_mode=pl.Buffered(3)
                # only if a profile shows exposed gather DMA latency.
                pl.BlockSpec((1, rows_per_step, lanes),
                             lambda i, j, perm, coeff: (perm[i], j, 0)),
            ],
            out_specs=pl.BlockSpec((1, rows_per_step, lanes),
                                   lambda i, j, perm, coeff: (i, j, 0)),
        )
        out = pl.pallas_call(
            _mixup_x_tiled_kernel,
            out_shape=jax.ShapeDtypeStruct((B, rows, lanes), x3.dtype),
            grid_spec=grid_spec,
            compiler_params=pltpu.CompilerParams(
                dimension_semantics=("parallel", "parallel"),
                vmem_limit_bytes=int(min(32 << 20,
                                         max(16 << 20,
                                             6 * block_bytes + (2 << 20)))),
            ),
            cost_estimate=cost,
        )(perm, coeffs, x3, x3)

    out = out.reshape(B, n_pad)
    if n_pad != N:
        out = out[:, :N]
    return out.reshape(orig_shape)


# ---------------------------------------------------------------------------
# Full Mixup.forward equivalent (non-dict input, y_aux=None)
# ---------------------------------------------------------------------------

def mixup_forward(x, y, perm, coeffs, num_classes, additive=False):
    bs = x.shape[0]

    # --- label one-hot encoding (glue, tiny) --------------------------------
    if num_classes > y.shape[-1]:
        y = jax.nn.one_hot(y.reshape(-1).astype(jnp.int32), num_classes,
                           dtype=jnp.float32)
        if y.shape[0] != bs:
            y = y.reshape(bs, -1, num_classes)

    # --- heavy elementwise mix of x in Pallas --------------------------------
    x_mix = mixup_x_pallas(x, perm, coeffs)

    # --- label mix (glue) -----------------------------------------------------
    if additive:
        y_mix = jnp.maximum(y, y[perm])
    else:
        if y.ndim == 1:
            y_mix = coeffs * y + (1.0 - coeffs) * y[perm]
        elif y.ndim == 2:
            y_mix = coeffs[:, None] * y + (1.0 - coeffs)[:, None] * y[perm]
        elif y.ndim == 3:
            y_mix = (coeffs[:, None, None] * y
                     + (1.0 - coeffs)[:, None, None] * y[perm])
        else:
            raise NotImplementedError

    # TODO(synk): dict-input (x_aux) / y_aux paths follow the identical mixing
    # pattern and would reuse mixup_x_pallas; not exercised here.
    return x_mix, y_mix, None, None


if __name__ == "__main__":
    key = jax.random.PRNGKey(0)
    k_x, k_y, k_perm, k_beta, k_x2, k_p2, k_b2 = jax.random.split(key, 7)

    NUM_CLASSES = 10
    ALPHA = 0.4

    # ---- test 1: packed (K samples / step) path, f32 NCHW -------------------
    B, C, H, W = 2, 4, 16, 16
    x = jax.random.normal(k_x, (B, C, H, W), dtype=jnp.float32)
    y = jax.random.randint(k_y, (B,), 0, NUM_CLASSES, dtype=jnp.int32)
    perm = jax.random.permutation(k_perm, B).astype(jnp.int32)
    coeffs = jax.random.beta(k_beta, ALPHA, ALPHA, (B,)).astype(jnp.float32)

    x_mix, y_mix, y_aux_mix, _ = mixup_forward(x, y, perm, coeffs, NUM_CLASSES)
    x_mix = jax.block_until_ready(x_mix)
    y_mix = jax.block_until_ready(y_mix)

    x_ref = (coeffs[:, None, None, None] * x
             + (1.0 - coeffs)[:, None, None, None] * x[perm])
    y_oh = jax.nn.one_hot(y, NUM_CLASSES, dtype=jnp.float32)
    y_ref = coeffs[:, None] * y_oh + (1.0 - coeffs)[:, None] * y_oh[perm]
    assert jnp.allclose(x_mix, x_ref, atol=1e-5), "x mix mismatch (packed path)"
    assert jnp.allclose(y_mix, y_ref, atol=1e-6), "y mix mismatch"

    # ---- test 2: tiled (feature-tiled, K=1) path, f32 -----------------------
    B2, C2 = 2, 8
    x2 = jax.random.normal(k_x2, (B2, C2, H, W), dtype=jnp.float32)
    perm2 = jax.random.permutation(k_p2, B2).astype(jnp.int32)
    coeffs2 = jax.random.beta(k_b2, ALPHA, ALPHA, (B2,)).astype(jnp.float32)
    # Small block cap forces feat_tiles > 1 -> exercises the tiled kernel.
    x2_mix = jax.block_until_ready(
        mixup_x_pallas(x2, perm2, coeffs2, max_block_bytes=8 * 128 * 4))
    x2_ref = (coeffs2[:, None, None, None] * x2
              + (1.0 - coeffs2)[:, None, None, None] * x2[perm2])
    assert jnp.allclose(x2_mix, x2_ref, atol=1e-5), "x mix mismatch (tiled path)"

    # ---- test 3: bf16 input (16-row sublane tiles, f32 blend math) ----------
    xb = x.astype(jnp.bfloat16)
    xb_mix = jax.block_until_ready(mixup_x_pallas(xb, perm, coeffs))
    xb_f32 = xb.astype(jnp.float32)
    xb_ref = (coeffs[:, None, None, None] * xb_f32
              + (1.0 - coeffs)[:, None, None, None] * xb_f32[perm])
    assert jnp.allclose(xb_mix.astype(jnp.float32), xb_ref,
                        atol=5e-2, rtol=1e-2), "x mix mismatch (bf16 path)"

    print("KERNEL_OK")
</pallas_src>

<mosaic_0001>
module attributes {stable_mosaic.version = 11 : i64} {
  func.func @_mixup_x_packed_kernel(%arg0: i32, %arg1: memref<2xi32, #tpu.memory_space<smem>>, %arg2: memref<2xf32, #tpu.memory_space<smem>>, %arg3: memref<2x8x128xf32, #tpu.memory_space<vmem>>, %arg4: memref<2x8x128xf32, #tpu.memory_space<any>>, %arg5: memref<2x8x128xf32, #tpu.memory_space<vmem>>, %arg6: memref<2x8x128xf32, #tpu.memory_space<vmem>>, %arg7: memref<2x!tpu.dma_semaphore, #tpu.memory_space<semaphore_mem>>) attributes {dimension_semantics = [#tpu.dimension_semantics<parallel>], iteration_bounds = array<i64: 1>, scalar_prefetch = 2 : i64, scratch_operands = 2 : i64, tpu.core_type = #tpu.core_type<tc>, window_params = [{transform_indices = @transform_0, window_bounds = array<i64: 2, 8, 128>}, {}, {transform_indices = @transform_2, window_bounds = array<i64: 2, 8, 128>}]} {
    %c2_i32 = arith.constant 2 : i32
    %0 = arith.muli %arg0, %c2_i32 : i32
    %c0_i32 = arith.constant 0 : i32
    %1 = arith.addi %0, %c0_i32 : i32
    %2 = arith.index_cast %1 : i32 to index
    %3 = memref.load %arg2[%2] : memref<2xf32, #tpu.memory_space<smem>>
    %c1_i32 = arith.constant 1 : i32
    %4 = arith.addi %0, %c1_i32 : i32
    %5 = arith.index_cast %4 : i32 to index
    %6 = memref.load %arg2[%5] : memref<2xf32, #tpu.memory_space<smem>>
    %c0_i32_0 = arith.constant 0 : i32
    %7 = arith.addi %0, %c0_i32_0 : i32
    %8 = arith.index_cast %7 : i32 to index
    %9 = memref.load %arg1[%8] : memref<2xi32, #tpu.memory_space<smem>>
    %c0_i32_1 = arith.constant 0 : i32
    %c0_i32_2 = arith.constant 0 : i32
    %c0_i32_3 = arith.constant 0 : i32
    %c0_i32_4 = arith.constant 0 : i32
    %10 = tpu.memref_slice %arg4[%9, %c0_i32_3, %c0_i32_4] : memref<2x8x128xf32, #tpu.memory_space<any>> -> memref<1x8x128xf32, #tpu.memory_space<any>>
    %11 = tpu.memref_squeeze %10 : memref<1x8x128xf32, #tpu.memory_space<any>> -> memref<8x128xf32, #tpu.memory_space<any>>
    %c0_i32_5 = arith.constant 0 : i32
    %c0_i32_6 = arith.constant 0 : i32
    %12 = tpu.memref_slice %arg6[%c0_i32_1, %c0_i32_5, %c0_i32_6] : memref<2x8x128xf32, #tpu.memory_space<vmem>> -> memref<1x8x128xf32, #tpu.memory_space<vmem>>
    %13 = tpu.memref_squeeze %12 : memref<1x8x128xf32, #tpu.memory_space<vmem>> -> memref<8x128xf32, #tpu.memory_space<vmem>>
    %14 = tpu.memref_slice %arg7[%c0_i32_2] : memref<2x!tpu.dma_semaphore, #tpu.memory_space<semaphore_mem>> -> memref<1x!tpu.dma_semaphore, #tpu.memory_space<semaphore_mem>>
    %15 = tpu.memref_squeeze %14 : memref<1x!tpu.dma_semaphore, #tpu.memory_space<semaphore_mem>> -> memref<!tpu.dma_semaphore, #tpu.memory_space<semaphore_mem>>
    tpu.enqueue_dma source(%11 : memref<8x128xf32, #tpu.memory_space<any>>) target(%13 : memref<8x128xf32, #tpu.memory_space<vmem>>) target_semaphore(%15 : memref<!tpu.dma_semaphore, #tpu.memory_space<semaphore_mem>>)
    %c1_i32_7 = arith.constant 1 : i32
    %16 = arith.addi %0, %c1_i32_7 : i32
    %17 = arith.index_cast %16 : i32 to index
    %18 = memref.load %arg1[%17] : memref<2xi32, #tpu.memory_space<smem>>
    %c1_i32_8 = arith.constant 1 : i32
    %c1_i32_9 = arith.constant 1 : i32
    %c0_i32_10 = arith.constant 0 : i32
    %c0_i32_11 = arith.constant 0 : i32
    %19 = tpu.memref_slice %arg4[%18, %c0_i32_10, %c0_i32_11] : memref<2x8x128xf32, #tpu.memory_space<any>> -> memref<1x8x128xf32, #tpu.memory_space<any>>
    %20 = tpu.memref_squeeze %19 : memref<1x8x128xf32, #tpu.memory_space<any>> -> memref<8x128xf32, #tpu.memory_space<any>>
    %c0_i32_12 = arith.constant 0 : i32
    %c0_i32_13 = arith.constant 0 : i32
    %21 = tpu.memref_slice %arg6[%c1_i32_8, %c0_i32_12, %c0_i32_13] : memref<2x8x128xf32, #tpu.memory_space<vmem>> -> memref<1x8x128xf32, #tpu.memory_space<vmem>>
    %22 = tpu.memref_squeeze %21 : memref<1x8x128xf32, #tpu.memory_space<vmem>> -> memref<8x128xf32, #tpu.memory_space<vmem>>
    %23 = tpu.memref_slice %arg7[%c1_i32_9] : memref<2x!tpu.dma_semaphore, #tpu.memory_space<semaphore_mem>> -> memref<1x!tpu.dma_semaphore, #tpu.memory_space<semaphore_mem>>
    %24 = tpu.memref_squeeze %23 : memref<1x!tpu.dma_semaphore, #tpu.memory_space<semaphore_mem>> -> memref<!tpu.dma_semaphore, #tpu.memory_space<semaphore_mem>>
    tpu.enqueue_dma source(%20 : memref<8x128xf32, #tpu.memory_space<any>>) target(%22 : memref<8x128xf32, #tpu.memory_space<vmem>>) target_semaphore(%24 : memref<!tpu.dma_semaphore, #tpu.memory_space<semaphore_mem>>)
    %c0_i32_14 = arith.constant 0 : i32
    %c0_i32_15 = arith.constant 0 : i32
    %c0_i32_16 = arith.constant 0 : i32
    %c0_i32_17 = arith.constant 0 : i32
    %25 = tpu.memref_slice %arg4[%9, %c0_i32_16, %c0_i32_17] : memref<2x8x128xf32, #tpu.memory_space<any>> -> memref<1x8x128xf32, #tpu.memory_space<any>>
    %26 = tpu.memref_squeeze %25 : memref<1x8x128xf32, #tpu.memory_space<any>> -> memref<8x128xf32, #tpu.memory_space<any>>
    %c0_i32_18 = arith.constant 0 : i32
    %c0_i32_19 = arith.constant 0 : i32
    %27 = tpu.memref_slice %arg6[%c0_i32_14, %c0_i32_18, %c0_i32_19] : memref<2x8x128xf32, #tpu.memory_space<vmem>> -> memref<1x8x128xf32, #tpu.memory_space<vmem>>
    %28 = tpu.memref_squeeze %27 : memref<1x8x128xf32, #tpu.memory_space<vmem>> -> memref<8x128xf32, #tpu.memory_space<vmem>>
    %29 = tpu.memref_slice %arg7[%c0_i32_15] : memref<2x!tpu.dma_semaphore, #tpu.memory_space<semaphore_mem>> -> memref<1x!tpu.dma_semaphore, #tpu.memory_space<semaphore_mem>>
    %30 = tpu.memref_squeeze %29 : memref<1x!tpu.dma_semaphore, #tpu.memory_space<semaphore_mem>> -> memref<!tpu.dma_semaphore, #tpu.memory_space<semaphore_mem>>
    tpu.wait_dma2 semaphore(%30 : memref<!tpu.dma_semaphore, #tpu.memory_space<semaphore_mem>>) src(%26 : memref<8x128xf32, #tpu.memory_space<any>>) dst(%28 : memref<8x128xf32, #tpu.memory_space<vmem>>)
    %c1_i32_20 = arith.constant 1 : i32
    %c1_i32_21 = arith.constant 1 : i32
    %c0_i32_22 = arith.constant 0 : i32
    %c0_i32_23 = arith.constant 0 : i32
    %31 = tpu.memref_slice %arg4[%18, %c0_i32_22, %c0_i32_23] : memref<2x8x128xf32, #tpu.memory_space<any>> -> memref<1x8x128xf32, #tpu.memory_space<any>>
    %32 = tpu.memref_squeeze %31 : memref<1x8x128xf32, #tpu.memory_space<any>> -> memref<8x128xf32, #tpu.memory_space<any>>
    %c0_i32_24 = arith.constant 0 : i32
    %c0_i32_25 = arith.constant 0 : i32
    %33 = tpu.memref_slice %arg6[%c1_i32_20, %c0_i32_24, %c0_i32_25] : memref<2x8x128xf32, #tpu.memory_space<vmem>> -> memref<1x8x128xf32, #tpu.memory_space<vmem>>
    %34 = tpu.memref_squeeze %33 : memref<1x8x128xf32, #tpu.memory_space<vmem>> -> memref<8x128xf32, #tpu.memory_space<vmem>>
    %35 = tpu.memref_slice %arg7[%c1_i32_21] : memref<2x!tpu.dma_semaphore, #tpu.memory_space<semaphore_mem>> -> memref<1x!tpu.dma_semaphore, #tpu.memory_space<semaphore_mem>>
    %36 = tpu.memref_squeeze %35 : memref<1x!tpu.dma_semaphore, #tpu.memory_space<semaphore_mem>> -> memref<!tpu.dma_semaphore, #tpu.memory_space<semaphore_mem>>
    tpu.wait_dma2 semaphore(%36 : memref<!tpu.dma_semaphore, #tpu.memory_space<semaphore_mem>>) src(%32 : memref<8x128xf32, #tpu.memory_space<any>>) dst(%34 : memref<8x128xf32, #tpu.memory_space<vmem>>)
    %c0 = arith.constant 0 : index
    %c0_26 = arith.constant 0 : index
    %c0_27 = arith.constant 0 : index
    %37 = vector.load %arg6[%c0, %c0_26, %c0_27] : memref<2x8x128xf32, #tpu.memory_space<vmem>>, vector<1x8x128xf32>
    %38 = vector.shape_cast %37 : vector<1x8x128xf32> to vector<8x128xf32>
    %c0_28 = arith.constant 0 : index
    %c0_29 = arith.constant 0 : index
    %c0_30 = arith.constant 0 : index
    %39 = vector.load %arg3[%c0_28, %c0_29, %c0_30] : memref<2x8x128xf32, #tpu.memory_space<vmem>>, vector<1x8x128xf32>
    %40 = vector.shape_cast %39 : vector<1x8x128xf32> to vector<8x128xf32>
    %41 = arith.subf %40, %38 : vector<8x128xf32>
    %42 = vector.broadcast %3 : f32 to vector<8x128xf32>
    %43 = arith.mulf %42, %41 : vector<8x128xf32>
    %44 = arith.addf %38, %43 : vector<8x128xf32>
    %c0_31 = arith.constant 0 : index
    %c0_32 = arith.constant 0 : index
    %c0_33 = arith.constant 0 : index
    %45 = vector.load %arg5[%c0_31, %c0_32, %c0_33] : memref<2x8x128xf32, #tpu.memory_space<vmem>>, vector<1x8x128xf32>
    %46 = vector.shape_cast %45 : vector<1x8x128xf32> to vector<8x128xf32>
    %47 = vector.shape_cast %44 : vector<8x128xf32> to vector<1x8x128xf32>
    tpu.vector_store %arg5[%c0_31, %c0_32, %c0_33], %47 {strides = array<i32>} : memref<2x8x128xf32, #tpu.memory_space<vmem>>, vector<1x8x128xf32>,
    %c1 = arith.constant 1 : index
    %c0_34 = arith.constant 0 : index
    %c0_35 = arith.constant 0 : index
    %48 = vector.load %arg6[%c1, %c0_34, %c0_35] : memref<2x8x128xf32, #tpu.memory_space<vmem>>, vector<1x8x128xf32>
    %49 = vector.shape_cast %48 : vector<1x8x128xf32> to vector<8x128xf32>
    %c1_36 = arith.constant 1 : index
    %c0_37 = arith.constant 0 : index
    %c0_38 = arith.constant 0 : index
    %50 = vector.load %arg3[%c1_36, %c0_37, %c0_38] : memref<2x8x128xf32, #tpu.memory_space<vmem>>, vector<1x8x128xf32>
    %51 = vector.shape_cast %50 : vector<1x8x128xf32> to vector<8x128xf32>
    %52 = arith.subf %51, %49 : vector<8x128xf32>
    %53 = vector.broadcast %6 : f32 to vector<8x128xf32>
    %54 = arith.mulf %53, %52 : vector<8x128xf32>
    %55 = arith.addf %49, %54 : vector<8x128xf32>
    %c1_39 = arith.constant 1 : index
    %c0_40 = arith.constant 0 : index
    %c0_41 = arith.constant 0 : index
    %56 = vector.load %arg5[%c1_39, %c0_40, %c0_41] : memref<2x8x128xf32, #tpu.memory_space<vmem>>, vector<1x8x128xf32>
    %57 = vector.shape_cast %56 : vector<1x8x128xf32> to vector<8x128xf32>
    %58 = vector.shape_cast %55 : vector<8x128xf32> to vector<1x8x128xf32>
    tpu.vector_store %arg5[%c1_39, %c0_40, %c0_41], %58 {strides = array<i32>} : memref<2x8x128xf32, #tpu.memory_space<vmem>>, vector<1x8x128xf32>,
    return
  }
  func.func @transform_0(%arg0: i32, %arg1: memref<2xi32, #tpu.memory_space<smem>>, %arg2: memref<2xf32, #tpu.memory_space<smem>>) -> (i32, i32, i32) {
    %c0_i32 = arith.constant 0 : i32
    %c0_i32_0 = arith.constant 0 : i32
    %c0_i32_1 = arith.constant 0 : i32
    return %arg0, %c0_i32, %c0_i32_0 : i32, i32, i32
  }
  func.func @transform_2(%arg0: i32, %arg1: memref<2xi32, #tpu.memory_space<smem>>, %arg2: memref<2xf32, #tpu.memory_space<smem>>) -> (i32, i32, i32) {
    %c0_i32 = arith.constant 0 : i32
    %c0_i32_0 = arith.constant 0 : i32
    %c0_i32_1 = arith.constant 0 : i32
    return %arg0, %c0_i32, %c0_i32_0 : i32, i32, i32
  }
}

</mosaic_0001>

<llo_original>
// kernel: tpu_custom_call.1
$region0: #{tpu_custom_call.1}
  #allocation0 [shape = 'u32[]', space=smem, size = 0x4, offset = 0x4, fixed_abs, tag = 'smem constant byte address 0x4 - core index']
  #allocation1 [shape = 'u32[72,128]{1,0:T(1,128)}', space=vmem, size = 0x9000, scoped, tag = 'internal scratch']
  #allocation2 [shape = 'f32[2,8,128]{2,1,0:T(8,128)}', space=vmem, size = 0x2000, scoped, tag = 'scratch operand']
  #allocation3 [shape = 's32[2]{0}', space=sflag, size = 0x8, scoped, tag = 'scratch operand']
  #allocation4 [shape = 's32[1]{0}', space=sflag, size = 0x4, scoped, tag = 'scoped memory for tpu_custom_call.1']
  #allocation5 [shape = 'u8[512]{0}', space=smem, size = 0x200, scoped, tag = 'prefetched SMEM operand 0']
  #allocation6 [shape = 'u8[512]{0}', space=smem, size = 0x200, scoped, tag = 'prefetched SMEM operand 1']
  #allocation11 [shape = 's32[]', space=sflag, size = 0x4, offset = 0, fixed_abs, tag = 'sflag constant byte address 0x0 - dummy sync flag']
  #allocation12 [shape = 's32[]', space=sflag, size = 0x4, offset = 0, fixed_abs, tag = 'sflag constant byte address 0x0 - dummy sync flag']
  #allocation13 [shape = 'u32[]', space=smem, size = 0x4, offset = 0x44, fixed_abs, tag = 'smem constant byte address 0x44 - assertion arg 0']
  #allocation14 [shape = 'u32[]', space=smem, size = 0x4, offset = 0x48, fixed_abs, tag = 'smem constant byte address 0x48 - assertion arg 1']
  #allocation15 [shape = 's32[]', space=sflag, size = 0x4, offset = 0, fixed_abs, tag = 'sflag constant byte address 0x0 - dummy sync flag']
  #allocation16 [shape = 's32[]', space=sflag, size = 0x4, offset = 0, fixed_abs, tag = 'sflag constant byte address 0x0 - dummy sync flag']
  %s0 = inlined_call_operand.hbm [shape: s32[2], index: 0, kind: input, shape index: {}]
  %s1 = inlined_call_operand.hbm [shape: f32[2], index: 1, kind: input, shape index: {}]
  %s2 = inlined_call_operand.hbm [shape: f32[2,8,128], index: 2, kind: input, shape index: {}]
  %s3 = inlined_call_operand.hbm [shape: f32[2,8,128], index: 3, kind: input, shape index: {}]
  %s4 = inlined_call_operand.hbm [shape: f32[2,8,128], index: 4, kind: output, shape index: {}]
  %s5 = sld [smem:[#allocation0]]
  $region26: #{tpu_custom_call.1} parent=0
    _
  %s7 = ssub.s32 1, %s5
  %s8 = scalar_select 0, %s7, %s5
  %s10 = sshll.u32 %s0, 4
  %s11 = int_to_ptr.hbm [resolvable:$true] %s10
  %13 = dma.hbm_to_smem %s11, 16, [#allocation5], [#allocation4]
  %s15 = sshll.u32 %s1, 4
  %s16 = int_to_ptr.hbm [resolvable:$true] %s15
  %18 = dma.hbm_to_smem %s16, 16, [#allocation6], [#allocation4]
  %20 = dma.done [#allocation4], 32
  %21 = sfence
  $region1: #{tpu_custom_call.1} parent=0
    #allocation7 [shape = 'u8[8192]{0}', space=vmem, size = 0x2000, scoped, tag = 'input window, operand 2, single buffered']
    #allocation8 [shape = 's32[1]{0}', space=sflag, size = 0x4, scoped, tag = 'scoped memory for tpu_custom_call.1']
    #allocation9 [shape = 's32[1]{0}', space=sflag, size = 0x4, scoped, tag = 'scoped memory for tpu_custom_call.1']
    #allocation10 [shape = 'u8[8192]{0}', space=vmem, size = 0x2000, scoped, tag = 'output window, operand 0, single buffered']
    %22 = vsyncpa [#allocation8], 0
    %23 = vsyncpa [#allocation9], 0
    // Predicated region
    $region2: #{tpu_custom_call.1} parent=1 // pred_check
      _
    $region3: #{tpu_custom_call.1} parent=1 // pred_check_branch
      %25 = sbr.rel (0) target = $region5
    $region4: #{tpu_custom_call.1} parent=1 // pred_region
      %27 = vsyncadd [#allocation8], 0
      %s28 = sshll.u32 %s2, 4
      %s29 = int_to_ptr.hbm [resolvable:$true] %s28
      %s30 = sshll.u32 [#allocation7], 4
      %s31 = int_to_ptr.vmem [resolvable:$true] %s30
      %36 = dma.hbm_to_vmem [thread:$0]  %s29, 256, %s31, [#allocation8], 128, 128, 8
    $region5: #{tpu_custom_call.1} parent=1 // pred_fallthru
      _
    // Predicated region
    $region6: #{tpu_custom_call.1} parent=1 // pred_check
      _
    $region7: #{tpu_custom_call.1} parent=1 // pred_check_branch
      %38 = sbr.rel (0) target = $region9
    $region8: #{tpu_custom_call.1} parent=1 // pred_region
      %40 = dma.done [#allocation8], 256
    $region9: #{tpu_custom_call.1} parent=1 // pred_fallthru
      _
    %s41 = smul.u32 0, 2
    %s42 = sld [smem:[#allocation6 + %s41]]
    %s43 = sadd.s32 %s41, 1
    %s44 = sld [smem:[#allocation6 + %s43]]
    %s45 = sld [smem:[#allocation5 + %s41]]
    %s46 = smul.u32 %s45, 8
    %s47 = scalar_lea.hbm %s3, %s46
    // Predicated region
    $region10: #{tpu_custom_call.1} parent=1 // pred_check
      _
    $region11: #{tpu_custom_call.1} parent=1 // pred_check_branch
      %49 = sbr.rel target = $region13
    $region12: #{tpu_custom_call.1} parent=1 // pred_region
      %50 = sst [smem:[#allocation13]] [#allocation12]
      %51 = sst [smem:[#allocation14]] [#allocation11]
    $region13: #{tpu_custom_call.1} parent=1 // pred_fallthru
      _
    %53 = shalt.err (0)
    %s55 = sshll.u32 %s47, 4
    %s56 = int_to_ptr.hbm [resolvable:$true] %s55
    %s57 = sshll.u32 [#allocation2], 4
    %s58 = int_to_ptr.vmem [resolvable:$true] %s57
    %60 = dma.hbm_to_vmem [thread:$0]  %s56, 128, %s58, [#allocation3]
    %s61 = sld [smem:[#allocation5 + %s43]]
    %s62 = smul.u32 %s61, 8
    %s63 = scalar_lea.hbm %s3, %s62
    %s64 = scalar_lea.vmem [#allocation2], 8
    %s65 = scalar_lea.sflag [#allocation3], 1
    // Predicated region
    $region14: #{tpu_custom_call.1} parent=1 // pred_check
      _
    $region15: #{tpu_custom_call.1} parent=1 // pred_check_branch
      %67 = sbr.rel target = $region17
    $region16: #{tpu_custom_call.1} parent=1 // pred_region
      %68 = sst [smem:[#allocation13]] [#allocation16]
      %69 = sst [smem:[#allocation14]] [#allocation15]
    $region17: #{tpu_custom_call.1} parent=1 // pred_fallthru
      _
    %71 = shalt.err (0)
    %s73 = sshll.u32 %s63, 4
    %s74 = int_to_ptr.hbm [resolvable:$true] %s73
    %s75 = sshll.u32 %s64, 4
    %s76 = int_to_ptr.vmem [resolvable:$true] %s75
    %78 = dma.hbm_to_vmem [thread:$0]  %s74, 128, %s76, %s65
    %s79 = smul.u32 8, 1
    %s80 = sshll.u32 %s79, 4
    %81 = dma.done [#allocation3], %s80
    %s82 = sshll.u32 %s79, 4
    %83 = dma.done %s65, %s82
    %v84 = vld [vmem:[#allocation2] sm:$0xff]
    %v85 = vld [vmem:[#allocation7] sm:$0xff]
    %v86 = vsub.f32 %v85, %v84
    %v87 = vstv %s42
    %v88 = vmul.f32 %v87, %v86
    %v89 = vadd.f32 %v84, %v88
    %90 = vst [vmem:[#allocation10] sm:$0xff] %v89
    %v91 = vld [vmem:[%s64] sm:$0xff]
    %s92 = scalar_lea.vmem [#allocation7], 8
    %v93 = vld [vmem:[%s92] sm:$0xff]
    %v94 = vsub.f32 %v93, %v91
    %v95 = vstv %s44
    %v96 = vmul.f32 %v95, %v94
    %v97 = vadd.f32 %v91, %v96
    %s98 = scalar_lea.vmem [#allocation10], 8
    %99 = vst [vmem:[%s98] sm:$0xff] %v97
    // Predicated region
    $region18: #{tpu_custom_call.1} parent=1 // pred_check
      _
    $region19: #{tpu_custom_call.1} parent=1 // pred_check_branch
      %101 = sbr.rel (0) target = $region21
    $region20: #{tpu_custom_call.1} parent=1 // pred_region
      %103 = vsyncadd [#allocation9], 0
      %s104 = sshll.u32 [#allocation10], 4
      %s105 = int_to_ptr.vmem [resolvable:$true] %s104
      %s106 = sshll.u32 %s4, 4
      %s107 = int_to_ptr.hbm [resolvable:$true] %s106
      %112 = dma.vmem_to_hbm [thread:$0]  %s105, 256, %s107, [#allocation9], 128, 128, 8
    $region21: #{tpu_custom_call.1} parent=1 // pred_fallthru
      _
    // Predicated region
    $region22: #{tpu_custom_call.1} parent=1 // pred_check
      _
    $region23: #{tpu_custom_call.1} parent=1 // pred_check_branch
      %114 = sbr.rel (0) target = $region25
    $region24: #{tpu_custom_call.1} parent=1 // pred_region
      %116 = dma.done [#allocation9], 256
    $region25: #{tpu_custom_call.1} parent=1 // pred_fallthru
      _
    %117 = vsyncpa [#allocation8], 1
    %118 = vsyncpa [#allocation9], 1
  %119 = vsyncmov [#allocation3]
  %s120 = vpop.sfrf %119
  %p121 = scmp.eq.s32.totalorder %s120, 0
  %p122 = pneg %p121
  %124 = shalt.err (%p122)
  %s125 = scalar_lea.sflag [#allocation3], 1
  %126 = vsyncmov %s125
  %s127 = vpop.sfrf %126
  %p128 = scmp.eq.s32.totalorder %s127, 0
  %p129 = pneg %p128
  %131 = shalt.err (%p129)

</llo_original>
